<compile_context>
chip_gen: v5e
topology: v5e:2x2
jax: 0.10.0
libtpu: 0.0.40
codegen_flags: <defaults>
</compile_context>

<pallas_src>
import functools
import math

import numpy as np
import jax
import jax.numpy as jnp
from jax.experimental import pallas as pl
from jax.experimental.pallas import tpu as pltpu

# ------------------------------------------------------------------ config ---
EMBED_DIM = 128
DEPTHS = (2, 2, 18, 2)          # swin_v2_b
NUM_HEADS = (4, 8, 16, 32)
WINDOW = 8
MLP_RATIO = 4
LN_EPS = 1e-5


# ---------------------------------------------------------------- tiling -----

def _pick_row_block(m):
    if m >= 2048:
        return 512
    if m >= 512:
        return 256
    if m >= 128:
        return 128
    return ((m + 7) // 8) * 8          # tiny M: single sublane-aligned tile


def _pick_col_block(n):
    for c in (512, 256, 128):
        if n % c == 0:
            return c
    return n


def _pick_window_batch(num_windows, heads):
    # batch several windows per grid step; keep the unrolled inner loop modest.
    for wb in (8, 4, 2, 1):
        if num_windows % wb == 0 and wb * heads <= 32:
            return wb
    return 1


# ------------------------------------------------- linear (+bias, +activation)

def _linear_kernel(x_ref, w_ref, b_ref, o_ref, *, activation):
    acc = jnp.dot(x_ref[...].astype(jnp.bfloat16), w_ref[...],
                  preferred_element_type=jnp.float32)
    acc = acc + b_ref[...].astype(jnp.float32)
    if activation == "gelu":
        acc = jax.nn.gelu(acc, approximate=False)     # exact GELU, like torch nn.GELU
    o_ref[...] = acc.astype(o_ref.dtype)


def _linear_ktiled_kernel(x_ref, w_ref, b_ref, o_ref, acc_ref, *, activation):
    @pl.when(pl.program_id(2) == 0)
    def _():
        acc_ref[...] = jnp.zeros_like(acc_ref)

    acc_ref[...] += jnp.dot(x_ref[...].astype(jnp.bfloat16), w_ref[...],
                            preferred_element_type=jnp.float32)

    @pl.when(pl.program_id(2) == pl.num_programs(2) - 1)
    def _():
        acc = acc_ref[...] + b_ref[...].astype(jnp.float32)
        if activation == "gelu":
            acc = jax.nn.gelu(acc, approximate=False)
        o_ref[...] = acc.astype(o_ref.dtype)


@functools.partial(jax.jit, static_argnames=("activation",))
def pallas_linear(x, w, b, activation=None):
    """x: [..., K] (f32) @ w: [K, N] (bf16) + b: [N] (f32), optional fused GELU."""
    *lead, K = x.shape
    N = w.shape[1]
    M = int(np.prod(lead)) if lead else 1
    x2 = x.reshape(M, K)
    bm = _pick_row_block(M)
    Mp = ((M + bm - 1) // bm) * bm
    if Mp != M:
        x2 = jnp.pad(x2, ((0, Mp - M), (0, 0)))
    bn = _pick_col_block(N)
    bk = 512 if (K >= 1024 and K % 512 == 0) else K
    n_k = K // bk
    b2 = b.reshape(1, N).astype(jnp.float32)

    if n_k == 1:
        out = pl.pallas_call(
            functools.partial(_linear_kernel, activation=activation),
            out_shape=jax.ShapeDtypeStruct((Mp, N), x.dtype),
            grid=(Mp // bm, N // bn),
            in_specs=[
                pl.BlockSpec((bm, K), lambda i, j: (i, 0)),
                pl.BlockSpec((K, bn), lambda i, j: (0, j)),
                pl.BlockSpec((1, bn), lambda i, j: (0, j)),
            ],
            out_specs=pl.BlockSpec((bm, bn), lambda i, j: (i, j)),
            compiler_params=pltpu.CompilerParams(
                dimension_semantics=("parallel", "parallel")),
        )(x2, w, b2)
    else:
        out = pl.pallas_call(
            functools.partial(_linear_ktiled_kernel, activation=activation),
            out_shape=jax.ShapeDtypeStruct((Mp, N), x.dtype),
            grid=(Mp // bm, N // bn, n_k),
            in_specs=[
                pl.BlockSpec((bm, bk), lambda i, j, k: (i, k)),
                pl.BlockSpec((bk, bn), lambda i, j, k: (k, j)),
                pl.BlockSpec((1, bn), lambda i, j, k: (0, j)),
            ],
            out_specs=pl.BlockSpec((bm, bn), lambda i, j, k: (i, j)),
            scratch_shapes=[pltpu.VMEM((bm, bn), jnp.float32)],
            compiler_params=pltpu.CompilerParams(
                dimension_semantics=("parallel", "parallel", "arbitrary")),
        )(x2, w, b2)
    return out[:M].reshape(*lead, N)


# ----------------------------------------------- layernorm (+fused residual) --

def _layernorm_kernel(*refs, eps, has_res):
    if has_res:
        x_ref, r_ref, g_ref, b_ref, o_ref = refs
    else:
        x_ref, g_ref, b_ref, o_ref = refs
        r_ref = None
    x = x_ref[...].astype(jnp.float32)
    mu = jnp.mean(x, axis=-1, keepdims=True)
    var = jnp.mean(jnp.square(x - mu), axis=-1, keepdims=True)
    y = (x - mu) * jax.lax.rsqrt(var + eps)
    y = y * g_ref[...] + b_ref[...]
    if has_res:
        y = y + r_ref[...].astype(jnp.float32)
    o_ref[...] = y.astype(o_ref.dtype)


@jax.jit
def pallas_layernorm(x, gamma, beta, residual=None):
    """LayerNorm over last dim; optionally fuses `residual + LN(x)` (post-norm Swin)."""
    *lead, C = x.shape
    M = int(np.prod(lead)) if lead else 1
    x2 = x.reshape(M, C)
    has_res = residual is not None
    r2 = residual.reshape(M, C) if has_res else None
    bm = _pick_row_block(M)
    Mp = ((M + bm - 1) // bm) * bm
    if Mp != M:
        x2 = jnp.pad(x2, ((0, Mp - M), (0, 0)))
        if has_res:
            r2 = jnp.pad(r2, ((0, Mp - M), (0, 0)))

    in_specs = [pl.BlockSpec((bm, C), lambda i: (i, 0))]
    args = [x2]
    if has_res:
        in_specs.append(pl.BlockSpec((bm, C), lambda i: (i, 0)))
        args.append(r2)
    in_specs += [pl.BlockSpec((1, C), lambda i: (0, 0)),
                 pl.BlockSpec((1, C), lambda i: (0, 0))]
    args += [gamma.reshape(1, C), beta.reshape(1, C)]

    out = pl.pallas_call(
        functools.partial(_layernorm_kernel, eps=LN_EPS, has_res=has_res),
        out_shape=jax.ShapeDtypeStruct((Mp, C), x.dtype),
        grid=(Mp // bm,),
        in_specs=in_specs,
        out_specs=pl.BlockSpec((bm, C), lambda i: (i, 0)),
        compiler_params=pltpu.CompilerParams(dimension_semantics=("parallel",)),
    )(*args)
    return out[:M].reshape(*lead, C)


# ----------------------------------------------------- windowed cosine attn ---

def _win_attn_kernel(*refs, heads, dim, wb, has_mask):
    if has_mask:
        scale_ref, qkv_ref, bias_ref, mask_ref, o_ref = refs
    else:
        scale_ref, qkv_ref, bias_ref, o_ref = refs
        mask_ref = None
    C = heads * dim
    for w in range(wb):
        for h in range(heads):
            lo = h * dim
            q = qkv_ref[w, :, lo:lo + dim].astype(jnp.float32)          # (N, D)
            k = qkv_ref[w, :, C + lo:C + lo + dim].astype(jnp.float32)
            v = qkv_ref[w, :, 2 * C + lo:2 * C + lo + dim].astype(jnp.float32)
            # cosine normalization (matches F.normalize with eps=1e-12)
            qn = q * jax.lax.rsqrt(jnp.maximum(
                jnp.sum(q * q, axis=-1, keepdims=True), 1e-24))
            kn = k * jax.lax.rsqrt(jnp.maximum(
                jnp.sum(k * k, axis=-1, keepdims=True), 1e-24))
            qn = qn * scale_ref[h]                                      # fold logit scale
            attn = jax.lax.dot_general(qn, kn, (((1,), (1,)), ((), ())),
                                       preferred_element_type=jnp.float32)
            attn = attn + bias_ref[h]
            if has_mask:
                attn = attn + mask_ref[w]
            attn = attn - jnp.max(attn, axis=-1, keepdims=True)
            p = jnp.exp(attn)
            p = p * pl.reciprocal(jnp.sum(p, axis=-1, keepdims=True), approx=True)
            o_ref[w, :, lo:lo + dim] = jnp.dot(
                p, v, preferred_element_type=jnp.float32).astype(o_ref.dtype)


@functools.partial(jax.jit,
                   static_argnames=("heads", "num_windows", "has_mask", "wb"))
def pallas_window_attention(qkv, rel_bias, mask, scale, *,
                            heads, num_windows, has_mask, wb):
    """qkv: (BW, N, 3C) in the torchvision [3][heads][D] channel layout.
    rel_bias: (heads, N, N). mask: (nW, N, N) or None. scale: (heads,) f32.
    Returns (BW, N, C) with heads concatenated along the last dim."""
    BW, N, threeC = qkv.shape
    C = threeC // 3
    dim = C // heads

    in_specs = [
        pl.BlockSpec(memory_space=pltpu.MemorySpace.SMEM),              # scale
        pl.BlockSpec((wb, N, threeC), lambda g: (g, 0, 0)),             # qkv
        pl.BlockSpec((heads, N, N), lambda g: (0, 0, 0)),               # rel bias
    ]
    args = [scale, qkv, rel_bias]
    if has_mask:
        nwb = num_windows // wb
        in_specs.append(pl.BlockSpec((wb, N, N), lambda g: (g % nwb, 0, 0)))
        args.append(mask)

    return pl.pallas_call(
        functools.partial(_win_attn_kernel, heads=heads, dim=dim,
                          wb=wb, has_mask=has_mask),
        out_shape=jax.ShapeDtypeStruct((BW, N, C), qkv.dtype),
        grid=(BW // wb,),
        in_specs=in_specs,
        out_specs=pl.BlockSpec((wb, N, C), lambda g: (g, 0, 0)),
        compiler_params=pltpu.CompilerParams(dimension_semantics=("parallel",)),
    )(*args)


# ------------------------------------------------------------------- glue ----

@functools.lru_cache(maxsize=None)
def _shift_attn_mask(pH, pW, ws, sh, sw):
    # exact port of torchvision's shifted-window attention mask
    m = np.zeros((pH, pW), np.float32)
    h_slices = ((0, -ws), (-ws, -sh), (-sh, None))
    w_slices = ((0, -ws), (-ws, -sw), (-sw, None))
    count = 0
    for hs in h_slices:
        for wsl in w_slices:
            m[hs[0]:hs[1], wsl[0]:wsl[1]] = count
            count += 1
    nW = (pH // ws) * (pW // ws)
    m = m.reshape(pH // ws, ws, pW // ws, ws).transpose(0, 2, 1, 3).reshape(nW, ws * ws)
    diff = m[:, None, :] - m[:, :, None]
    return np.where(diff != 0, np.float32(-100.0), np.float32(0.0))


def _relative_position_bias(cpb_w1, cpb_b1, cpb_w2, ws, heads):
    # SwinV2 continuous position bias (CPB MLP), precomputed once per block.
    rc = np.arange(-(ws - 1), ws, dtype=np.float32)
    table = np.stack(np.meshgrid(rc, rc, indexing="ij"), axis=-1)
    table = table / (ws - 1) * 8.0
    table = np.sign(table) * np.log2(np.abs(table) + 1.0) / 3.0
    table = table.reshape(-1, 2)
    hidden = jax.nn.relu(jnp.asarray(table) @ cpb_w1 + cpb_b1)
    bt = hidden @ cpb_w2                                            # ((2ws-1)^2, heads)
    coords = np.stack(np.meshgrid(np.arange(ws), np.arange(ws), indexing="ij")).reshape(2, -1)
    rel = (coords[:, :, None] - coords[:, None, :]).transpose(1, 2, 0).astype(np.int64)
    rel[..., 0] += ws - 1
    rel[..., 1] += ws - 1
    rel[..., 0] *= 2 * ws - 1
    idx = rel.sum(-1).reshape(-1)
    N = ws * ws
    rpb = jnp.transpose(bt[idx].reshape(N, N, heads), (2, 0, 1))
    return 16.0 * jax.nn.sigmoid(rpb)                               # (heads, N, N)


def shifted_window_attention_v2(x, p, heads, ws, shift):
    B, H, W, C = x.shape
    pad_b, pad_r = (-H) % ws, (-W) % ws
    xp = jnp.pad(x, ((0, 0), (0, pad_b), (0, pad_r), (0, 0)))
    _, pH, pW, _ = xp.shape
    sh, sw = shift
    if ws >= pH:
        sh = 0
    if ws >= pW:
        sw = 0
    shifted = (sh > 0) or (sw > 0)
    if shifted:
        xp = jnp.roll(xp, shift=(-sh, -sw), axis=(1, 2))
    nH, nW_ = pH // ws, pW // ws
    num_windows = nH * nW_
    N = ws * ws
    xw = xp.reshape(B, nH, ws, nW_, ws, C).transpose(0, 1, 3, 2, 4, 5)
    xw = xw.reshape(B * num_windows, N, C)

    qkv = pallas_linear(xw, p["qkv_w"], p["qkv_b"])                  # (BW, N, 3C)
    scale = jnp.exp(jnp.minimum(p["logit_scale"], math.log(100.0)))  # (heads,)
    mask = jnp.asarray(_shift_attn_mask(pH, pW, ws, sh, sw)) if shifted else None
    wb = _pick_window_batch(num_windows, heads)

    o = pallas_window_attention(qkv, p["rel_bias"], mask, scale,
                                heads=heads, num_windows=num_windows,
                                has_mask=shifted, wb=wb)             # (BW, N, C)
    o = pallas_linear(o, p["proj_w"], p["proj_b"])

    o = o.reshape(B, nH, nW_, ws, ws, C).transpose(0, 1, 3, 2, 4, 5).reshape(B, pH, pW, C)
    if shifted:
        o = jnp.roll(o, shift=(sh, sw), axis=(1, 2))
    return o[:, :H, :W, :]


def swin_block_v2(x, p, heads, ws, shift):
    # TODO(synk): stochastic depth / dropout implemented as eval-mode identity.
    a = shifted_window_attention_v2(x, p, heads, ws, shift)
    x = pallas_layernorm(a, p["norm1_g"], p["norm1_b"], residual=x)   # x + LN(attn(x))
    h = pallas_linear(x, p["fc1_w"], p["fc1_b"], activation="gelu")
    h = pallas_linear(h, p["fc2_w"], p["fc2_b"])
    x = pallas_layernorm(h, p["norm2_g"], p["norm2_b"], residual=x)   # x + LN(mlp(x))
    return x


def patch_merging_v2(x, p):
    B, H, W, C = x.shape
    x = jnp.pad(x, ((0, 0), (0, H % 2), (0, W % 2), (0, 0)))
    x0 = x[:, 0::2, 0::2, :]
    x1 = x[:, 1::2, 0::2, :]
    x2 = x[:, 0::2, 1::2, :]
    x3 = x[:, 1::2, 1::2, :]
    x = jnp.concatenate([x0, x1, x2, x3], axis=-1)                   # (..., 4C)
    x = pallas_linear(x, p["red_w"], p["red_b"])                     # Linear(4C, 2C, no bias)
    return pallas_layernorm(x, p["ln_g"], p["ln_b"])


def model_forward(params, imgs):
    """Equivalent of satlas Model().forward(imgs) with default args (SWINB, no FPN, no head)."""
    # TODO(synk): FPN / Upsample / segmentation head not included (fpn=False, head=None default).
    B, Cin, H, W = imgs.shape
    # patch embed: Conv2d(Cin, 128, k=4, s=4) as patchify + matmul, then LayerNorm (NHWC)
    ph, pw = H // 4, W // 4
    x = imgs.reshape(B, Cin, ph, 4, pw, 4).transpose(0, 2, 4, 1, 3, 5).reshape(B, ph, pw, Cin * 16)
    pe = params["patch_embed"]
    x = pallas_linear(x, pe["w"], pe["b"])
    x = pallas_layernorm(x, pe["ln_g"], pe["ln_b"])

    outputs = []
    for s in range(4):
        heads = NUM_HEADS[s]
        for i, bp in enumerate(params["stages"][s]):
            shift = (0, 0) if i % 2 == 0 else (WINDOW // 2, WINDOW // 2)
            x = swin_block_v2(x, bp, heads, WINDOW, shift)
        outputs.append(jnp.transpose(x, (0, 3, 1, 2)))               # NHWC -> NCHW
        if s < 3:
            x = patch_merging_v2(x, params["merges"][s])
    # SwinBackbone returns the 4 stage outputs (strides 4/8/16/32)
    return outputs


# --------------------------------------------------------------- parameters ---

class _KeyGen:
    def __init__(self, key):
        self.key = key

    def __call__(self):
        self.key, sub = jax.random.split(self.key)
        return sub


def init_params(key, num_channels=3):
    kg = _KeyGen(key)

    def w(shape, dtype=jnp.bfloat16):
        # MXU weights stored in bf16; small CPB weights stay f32 (host precompute).
        return (0.02 * jax.random.normal(kg(), shape, jnp.float32)).astype(dtype)

    def zeros(shape):
        return jnp.zeros(shape, jnp.float32)

    params = {
        "patch_embed": {
            "w": w((num_channels * 16, EMBED_DIM)),
            "b": zeros((EMBED_DIM,)),
            "ln_g": jnp.ones((EMBED_DIM,), jnp.float32),
            "ln_b": zeros((EMBED_DIM,)),
        }
    }
    stages, merges = [], []
    for s in range(4):
        C = EMBED_DIM * (2 ** s)
        h = NUM_HEADS[s]
        blocks = []
        for _ in range(DEPTHS[s]):
            cpb_w1 = w((2, 512), jnp.float32)
            cpb_b1 = zeros((512,))
            cpb_w2 = w((512, h), jnp.float32)
            blocks.append({
                "qkv_w": w((C, 3 * C)),
                "qkv_b": zeros((3 * C,)),                # k-bias zero (as in SwinV2 init)
                "proj_w": w((C, C)),
                "proj_b": zeros((C,)),
                "logit_scale": jnp.full((h,), math.log(10.0), jnp.float32),
                "rel_bias": _relative_position_bias(cpb_w1, cpb_b1, cpb_w2, WINDOW, h),
                "norm1_g": jnp.ones((C,), jnp.float32), "norm1_b": zeros((C,)),
                "norm2_g": jnp.ones((C,), jnp.float32), "norm2_b": zeros((C,)),
                "fc1_w": w((C, MLP_RATIO * C)), "fc1_b": zeros((MLP_RATIO * C,)),
                "fc2_w": w((MLP_RATIO * C, C)), "fc2_b": zeros((C,)),
            })
        stages.append(blocks)
        if s < 3:
            merges.append({
                "red_w": w((4 * C, 2 * C)),
                "red_b": zeros((2 * C,)),                # reduction has no bias in torch
                "ln_g": jnp.ones((2 * C,), jnp.float32),
                "ln_b": zeros((2 * C,)),
            })
    params["stages"] = stages
    params["merges"] = merges
    return params


# --------------------------------------------------------------------- main ---

if __name__ == "__main__":
    key = jax.random.PRNGKey(0)
    pkey, xkey = jax.random.split(key)
    params = init_params(pkey, num_channels=3)

    imgs = jax.random.normal(xkey, (2, 3, 64, 64), jnp.float32)      # NCHW like PyTorch
    outs = model_forward(params, imgs)
    outs = jax.block_until_ready(outs)

    expected = [(2, 128, 16, 16), (2, 256, 8, 8), (2, 512, 4, 4), (2, 1024, 2, 2)]
    got = [tuple(int(d) for d in o.shape) for o in outs]
    assert got == expected, (got, expected)
    assert all(bool(jnp.all(jnp.isfinite(o))) for o in outs)
    print("KERNEL_OK")
</pallas_src>

<mosaic_0001>
module attributes {stable_mosaic.version = 11 : i64} {
  func.func @_linear_kernel(%arg0: i32, %arg1: i32, %arg2: memref<256x48xf32, #tpu.memory_space<vmem>>, %arg3: memref<48x128xbf16, #tpu.memory_space<vmem>>, %arg4: memref<1x128xf32, #tpu.memory_space<vmem>>, %arg5: memref<256x128xf32, #tpu.memory_space<vmem>>) attributes {dimension_semantics = [#tpu.dimension_semantics<parallel>, #tpu.dimension_semantics<parallel>], iteration_bounds = array<i64: 2, 1>, scalar_prefetch = 0 : i64, scratch_operands = 0 : i64, tpu.core_type = #tpu.core_type<tc>, window_params = [{transform_indices = @transform_0, window_bounds = array<i64: 256, 48>}, {transform_indices = @transform_1, window_bounds = array<i64: 48, 128>}, {transform_indices = @transform_2, window_bounds = array<i64: 1, 128>}, {transform_indices = @transform_3, window_bounds = array<i64: 256, 128>}]} {
    %c0 = arith.constant 0 : index
    %c0_0 = arith.constant 0 : index
    %0 = vector.load %arg2[%c0, %c0_0] : memref<256x48xf32, #tpu.memory_space<vmem>>, vector<256x48xf32>
    %1 = arith.truncf %0 : vector<256x48xf32> to vector<256x48xbf16>
    %c0_1 = arith.constant 0 : index
    %c0_2 = arith.constant 0 : index
    %2 = vector.load %arg3[%c0_1, %c0_2] : memref<48x128xbf16, #tpu.memory_space<vmem>>, vector<48x128xbf16>
    %cst = arith.constant dense<0.000000e+00> : vector<256x128xf32>
    %3 = tpu.matmul %1, %2, %cst {dimension_numbers = #tpu.dot_dimension_numbers<[1], [0], [0], [1], [0, 0, 1, 1], [], []>} : vector<256x48xbf16>, vector<48x128xbf16>, vector<256x128xf32> -> vector<256x128xf32>
    %c0_3 = arith.constant 0 : index
    %c0_4 = arith.constant 0 : index
    %4 = vector.load %arg4[%c0_3, %c0_4] : memref<1x128xf32, #tpu.memory_space<vmem>>, vector<1x128xf32>
    %5 = vector.broadcast %4 : vector<1x128xf32> to vector<256x128xf32>
    %6 = arith.addf %3, %5 : vector<256x128xf32>
    %c0_5 = arith.constant 0 : index
    %c0_6 = arith.constant 0 : index
    %7 = vector.load %arg5[%c0_5, %c0_6] : memref<256x128xf32, #tpu.memory_space<vmem>>, vector<256x128xf32>
    tpu.vector_store %arg5[%c0_5, %c0_6], %6 {strides = array<i32>} : memref<256x128xf32, #tpu.memory_space<vmem>>, vector<256x128xf32>,
    return
  }
  func.func @transform_0(%arg0: i32, %arg1: i32) -> (i32, i32) {
    %c0_i32 = arith.constant 0 : i32
    %c0_i32_0 = arith.constant 0 : i32
    return %arg0, %c0_i32 : i32, i32
  }
  func.func @transform_1(%arg0: i32, %arg1: i32) -> (i32, i32) {
    %c0_i32 = arith.constant 0 : i32
    %c0_i32_0 = arith.constant 0 : i32
    return %c0_i32, %arg1 : i32, i32
  }
  func.func @transform_2(%arg0: i32, %arg1: i32) -> (i32, i32) {
    %c0_i32 = arith.constant 0 : i32
    %c0_i32_0 = arith.constant 0 : i32
    return %c0_i32, %arg1 : i32, i32
  }
  func.func @transform_3(%arg0: i32, %arg1: i32) -> (i32, i32) {
    %c0_i32 = arith.constant 0 : i32
    return %arg0, %arg1 : i32, i32
  }
}

</mosaic_0001>

<llo_original>
// kernel: pallas_linear.1
$region0: #{pallas_linear.1}
  #allocation0 [shape = 'u32[]', space=smem, size = 0x4, offset = 0x4, fixed_abs, tag = 'smem constant byte address 0x4 - core index']
  #allocation1 [shape = 'u32[72,128]{1,0:T(1,128)}', space=vmem, size = 0x9000, scoped, tag = 'internal scratch']
  %s0 = inlined_call_operand.hbm [shape: f32[512,48], index: 0, kind: input, shape index: {}]
  %s1 = inlined_call_operand.hbm [shape: bf16[48,128], index: 1, kind: input, shape index: {}]
  %s2 = inlined_call_operand.vmem [shape: f32[1,128], index: 2, kind: input, shape index: {}]
  %s3 = inlined_call_operand.hbm [shape: f32[512,128], index: 3, kind: output, shape index: {}]
  %s4 = sld [smem:[#allocation0]]
  $region53: #{pallas_linear.1} parent=0
    _
  %s6 = ssub.s32 1, %s4
  %s7 = scalar_select 0, %s6, %s4
  $region1: #{pallas_linear.1} parent=0
    #allocation2 [shape = 'u8[262144]{0}', space=vmem, size = 0x40000, scoped, tag = 'input window, operand 0']
    #allocation3 [shape = 's32[2]{0}', space=sflag, size = 0x8, scoped, tag = 'scoped memory for pallas_linear.1']
    #allocation4 [shape = 's32[2]{0}', space=sflag, size = 0x8, scoped, tag = 'scoped memory for pallas_linear.1']
    #allocation5 [shape = 'u8[12288]{0}', space=vmem, size = 0x3000, scoped, tag = 'input window, operand 1, single buffered']
    #allocation6 [shape = 's32[1]{0}', space=sflag, size = 0x4, scoped, tag = 'scoped memory for pallas_linear.1']
    #allocation7 [shape = 'u8[262144]{0}', space=vmem, size = 0x40000, scoped, tag = 'output window, operand 0']
    %8 = vsyncpa [#allocation3], 0
    %s9 = scalar_lea.sflag [#allocation3], 1
    %10 = vsyncpa %s9, 0
    %11 = vsyncpa [#allocation6], 0
    %12 = vsyncpa [#allocation4], 0
    %s13 = scalar_lea.sflag [#allocation4], 1
    %14 = vsyncpa %s13, 0
    loop: start=0, step=1, limit=4
    $region2: #{pallas_linear.1} parent=1 // loop_pre_header
      _
    $region3: #{pallas_linear.1} parent=1 // loop_header
      %s16 = sphi 0, %s20
      %p17 = scmp.ge.s32.totalorder %s16, 4
      %s23 = sphi 0, %s35
      %s24 = sphi 0, %s31
      %s25 = sphi 0, %s23
      %s26 = sphi 0, %s24
      %s27 = sphi 0, %s25
      %s28 = sphi 0, %s26
      %s38 = sphi 0, %s40
      %s41 = sphi 0, %s38
      %s42 = sphi 0, %s41
      %s58 = sphi 0, %s42
      %s64 = sphi 0, %s66
      %s67 = sphi 0, %s64
      %s68 = sphi 0, %s67
      %s84 = sphi 0, %s68
      %s90 = sphi 0, %s92
      %s93 = sphi 0, %s90
      %s94 = sphi 0, %s93
      %s110 = sphi 0, %s94
      %s118 = sphi 0, %s120
      %s121 = sphi 0, %s118
      %s122 = sphi 0, %s121
      %s138 = sphi 0, %s122
    $region4: #{pallas_linear.1} parent=1 // loop_header_branch
      %19 = sbr.rel (%p17) target = $region8
    $region5: #{pallas_linear.1} parent=1 // loop_body
      %s21 = ssub.s32 %s16, 1
      %s22 = ssub.s32 %s16, 2
      %s29 = sadd.s32 1, %s24
      %p30 = scmp.ge.s32.totalorder %s29, 1
      %s31 = scalar_select %p30, 0, %s29
      %s32 = sadd.s32 1, %s23
      %s33 = scalar_select %p30, %s32, %s23
      %p34 = scmp.ge.s32.totalorder %s33, 2
      %s35 = scalar_select %p34, 0, %s33
      %s36 = ssub.s32 %s23, %s35
      %p37 = scmp.eq.s32.totalorder %s36, 0
      %s39 = sadd.s32 %s38, 1
      %s40 = scalar_select %p37, %s38, %s39
      %p43 = pneg %p37
      %p44 = scmp.eq.s32.totalorder %s16, 1
      %p45 = por %p43, %p44
      %p46 = scmp.ne.s32.totalorder %s38, %s41
      %p47 = scmp.eq.s32.totalorder %s16, 0
      %p48 = por %p46, %p47
      %p49 = scmp.ne.s32.totalorder %s38, %s41
      %p50 = scmp.eq.s32.totalorder %s21, 1
      %p51 = por %p49, %p50
      %p52 = scmp.ne.s32.totalorder %s41, %s42
      %p53 = scmp.eq.s32.totalorder %s21, 0
      %p54 = por %p52, %p53
      %p55 = scmp.ne.s32.totalorder %s41, %s42
      %p56 = scmp.eq.s32.totalorder %s22, 1
      %p57 = por %p55, %p56
      %p59 = scmp.ne.s32.totalorder %s42, %s58
      %p60 = scmp.eq.s32.totalorder %s22, 0
      %p61 = por %p59, %p60
      %s62 = ssub.s32 %s24, %s31
      %p63 = scmp.eq.s32.totalorder %s62, 0
      %s65 = sadd.s32 %s64, 1
      %s66 = scalar_select %p63, %s64, %s65
      %p69 = pneg %p63
      %p70 = scmp.eq.s32.totalorder %s16, 1
      %p71 = por %p69, %p70
      %p72 = scmp.ne.s32.totalorder %s64, %s67
      %p73 = scmp.eq.s32.totalorder %s16, 0
      %p74 = por %p72, %p73
      %p75 = scmp.ne.s32.totalorder %s64, %s67
      %p76 = scmp.eq.s32.totalorder %s21, 1
      %p77 = por %p75, %p76
      %p78 = scmp.ne.s32.totalorder %s67, %s68
      %p79 = scmp.eq.s32.totalorder %s21, 0
      %p80 = por %p78, %p79
      %p81 = scmp.ne.s32.totalorder %s67, %s68
      %p82 = scmp.eq.s32.totalorder %s22, 1
      %p83 = por %p81, %p82
      %p85 = scmp.ne.s32.totalorder %s68, %s84
      %p86 = scmp.eq.s32.totalorder %s22, 0
      %p87 = por %p85, %p86
      %s88 = ssub.s32 %s24, %s31
      %p89 = scmp.eq.s32.totalorder %s88, 0
      %s91 = sadd.s32 %s90, 1
      %s92 = scalar_select %p89, %s90, %s91
      %p95 = pneg %p89
      %p96 = scmp.eq.s32.totalorder %s16, 1
      %p97 = por %p95, %p96
      %p98 = scmp.ne.s32.totalorder %s90, %s93
      %p99 = scmp.eq.s32.totalorder %s16, 0
      %p100 = por %p98, %p99
      %p101 = scmp.ne.s32.totalorder %s90, %s93
      %p102 = scmp.eq.s32.totalorder %s21, 1
      %p103 = por %p101, %p102
      %p104 = scmp.ne.s32.totalorder %s93, %s94
      %p105 = scmp.eq.s32.totalorder %s21, 0
      %p106 = por %p104, %p105
      %p107 = scmp.ne.s32.totalorder %s93, %s94
      %p108 = scmp.eq.s32.totalorder %s22, 1
      %p109 = por %p107, %p108
      %p111 = scmp.ne.s32.totalorder %s94, %s110
      %p112 = scmp.eq.s32.totalorder %s22, 0
      %p113 = por %p111, %p112
      %s114 = ssub.s32 %s23, %s35
      %s115 = ssub.s32 %s24, %s31
      %s116 = sor.u32 %s114, %s115
      %p117 = scmp.eq.s32.totalorder %s116, 0
      %s119 = sadd.s32 %s118, 1
      %s120 = scalar_select %p117, %s118, %s119
      %p123 = pneg %p117
      %p124 = scmp.eq.s32.totalorder %s16, 1
      %p125 = por %p123, %p124
      %p126 = scmp.ne.s32.totalorder %s118, %s121
      %p127 = scmp.eq.s32.totalorder %s16, 0
      %p128 = por %p126, %p127
      %p129 = scmp.ne.s32.totalorder %s118, %s121
      %p130 = scmp.eq.s32.totalorder %s21, 1
      %p131 = por %p129, %p130
      %p132 = scmp.ne.s32.totalorder %s121, %s122
      %p133 = scmp.eq.s32.totalorder %s21, 0
      %p134 = por %p132, %p133
      %p135 = scmp.ne.s32.totalorder %s121, %s122
      %p136 = scmp.eq.s32.totalorder %s22, 1
      %p137 = por %p135, %p136
      %p139 = scmp.ne.s32.totalorder %s122, %s138
      %p140 = scmp.eq.s32.totalorder %s22, 0
      %p141 = por %p139, %p140
      %p142 = scmp.le.s32.totalorder 1, %s16
      %p143 = scmp.lt.s32.totalorder %s16, 3
      %p144 = pnand %p142, %p143
      %p145 = pneg %p144
      // Predicated region
      $region9: #{pallas_linear.1} parent=5 // pred_check
        _
      $region10: #{pallas_linear.1} parent=5 // pred_check_branch
        %147 = sbr.rel (%p144) target = $region12
      $region11: #{pallas_linear.1} parent=5 // pred_region
        %s148 = ssub.s32 %s16, 1
        // Predicated region
        $region13: #{pallas_linear.1} parent=11 // pred_check
          %p149 = pneg %p80
        $region14: #{pallas_linear.1} parent=11 // pred_check_branch
          %151 = sbr.rel (%p149) target = $region16
        $region15: #{pallas_linear.1} parent=11 // pred_region
          %153 = vsyncadd [#allocation6], 0
          %s154 = smul.addr %s26, 4
          %s155 = scalar_lea.hbm %s1, %s154
          %s156 = sshll.u32 %s155, 4
          %s157 = int_to_ptr.hbm [resolvable:$true] %s156
          %s158 = sshll.u32 [#allocation5], 4
          %s159 = int_to_ptr.vmem [resolvable:$true] %s158
          %164 = dma.hbm_to_vmem [thread:$0]  %s157, 384, %s159, [#allocation6], 64, 64, 4
        $region16: #{pallas_linear.1} parent=11 // pred_fallthru
          _
        // Predicated region
        $region17: #{pallas_linear.1} parent=11 // pred_check
          %p165 = pneg %p106
        $region18: #{pallas_linear.1} parent=11 // pred_check_branch
          %167 = sbr.rel (%p165) target = $region20
        $region19: #{pallas_linear.1} parent=11 // pred_region
          %p168 = scmp.lt.s32.totalorder %s26, 0
          %s169 = scalar_select %p168, %s26, 0
          %s170 = scalar_lea.vmem %s2, %s169
        $region20: #{pallas_linear.1} parent=11 // pred_fallthru
          _
      $region12: #{pallas_linear.1} parent=5 // pred_fallthru
        _
      %p171 = scmp.lt.s32.totalorder %s16, 2
      // Predicated region
      $region21: #{pallas_linear.1} parent=5 // pred_check
        %p172 = pneg %p171
      $region22: #{pallas_linear.1} parent=5 // pred_check_branch
        %174 = sbr.rel (%p172) target = $region24
      $region23: #{pallas_linear.1} parent=5 // pred_region
        // Predicated region
        $region25: #{pallas_linear.1} parent=23 // pred_check
          %p175 = pneg %p48
        $region26: #{pallas_linear.1} parent=23 // pred_check_branch
          %177 = sbr.rel (%p175) target = $region28
        $region27: #{pallas_linear.1} parent=23 // pred_region
          %s178 = sand.u32 %s38, 1
          %s179 = scalar_lea.sflag [#allocation3], %s178
          %s180 = sand.u32 %s38, 1
          %s181 = smul.addr %s180, 256
          %s182 = scalar_lea.vmem [#allocation2], %s181
          %s183 = smul.u32 32, %s23
          %185 = vsyncadd %s179, 0
          %s186 = smul.addr %s183, 8
          %s187 = scalar_lea.hbm %s0, %s186
          %s188 = sshll.u32 %s187, 4
          %s189 = int_to_ptr.hbm [resolvable:$true] %s188
          %s190 = sshll.u32 %s182, 4
          %s191 = int_to_ptr.vmem [resolvable:$true] %s190
          %196 = dma.hbm_to_vmem [thread:$0]  %s189, 4096, %s191, %s179, 128, 128, 8
        $region28: #{pallas_linear.1} parent=23 // pred_fallthru
          _
      $region24: #{pallas_linear.1} parent=5 // pred_fallthru
        _
      %p197 = scmp.le.s32.totalorder 1, %s16
      %p198 = scmp.lt.s32.totalorder %s16, 3
      %p199 = pnand %p197, %p198
      %p200 = pneg %p199
      // Predicated region
      $region29: #{pallas_linear.1} parent=5 // pred_check
        _
      $region30: #{pallas_linear.1} parent=5 // pred_check_branch
        %202 = sbr.rel (%p199) target = $region32
      $region31: #{pallas_linear.1} parent=5 // pred_region
        %s203 = ssub.s32 %s16, 1
        %s204 = sand.u32 %s41, 1
        %s205 = scalar_lea.sflag [#allocation3], %s204
        %s206 = sand.u32 %s41, 1
        %s207 = smul.addr %s206, 256
        %s208 = scalar_lea.vmem [#allocation2], %s207
        // Predicated region
        $region33: #{pallas_linear.1} parent=31 // pred_check
          %p209 = pneg %p54
        $region34: #{pallas_linear.1} parent=31 // pred_check_branch
          %211 = sbr.rel (%p209) target = $region36
        $region35: #{pallas_linear.1} parent=31 // pred_region
          %213 = dma.done %s205, 4096
        $region36: #{pallas_linear.1} parent=31 // pred_fallthru
          _
        // Predicated region
        $region37: #{pallas_linear.1} parent=31 // pred_check
          %p214 = pneg %p80
        $region38: #{pallas_linear.1} parent=31 // pred_check_branch
          %216 = sbr.rel (%p214) target = $region40
        $region39: #{pallas_linear.1} parent=31 // pred_region
          %218 = dma.done [#allocation6], 384
        $region40: #{pallas_linear.1} parent=31 // pred_fallthru
          _
        %s219 = sand.u32 %s41, 1
        %s220 = scalar_lea.sflag [#allocation3], %s219
        %s221 = sand.u32 %s41, 1
        %s222 = smul.addr %s221, 256
        %s223 = scalar_lea.vmem [#allocation2], %s222
        %p224 = pneg %p54
        %p225 = pneg %p51
        %p226 = pneg %p80
        %p227 = pneg %p77
        %p228 = scmp.lt.s32.totalorder %s26, 0
        %s229 = scalar_select %p228, %s26, 0
        %s230 = scalar_lea.vmem %s2, %s229
        %p231 = pneg %p106
        %p232 = pneg %p103
        %p233 = pneg %p134
        %p234 = pneg %p131
        %s235 = sand.u32 %s121, 1
        %s236 = scalar_lea.sflag [#allocation4], %s235
        %s237 = sand.u32 %s121, 1
        %s238 = smul.addr %s237, 256
        %s239 = scalar_lea.vmem [#allocation7], %s238
        %s240 = smul.u32 32, %s25
        %p241 = scmp.lt.s32.totalorder %s26, 0
        %s242 = scalar_select %p241, %s26, 0
        %s243 = scalar_lea.vmem %s2, %s242
        %s244 = smul.u32 32, %s25
        %v246 = vld [vmem:[%s208] sm:$0xff]
        %v247 = vld [vmem:[%s208 + $0x8] sm:$0xff]
        %v248 = vld [vmem:[%s208 + $0x10] sm:$0xff]
        %v249 = vld [vmem:[%s208 + $0x18] sm:$0xff]
        %v250 = vld [vmem:[%s208 + $0x20] sm:$0xff]
        %v251 = vld [vmem:[%s208 + $0x28] sm:$0xff]
        %v252 = vld [vmem:[%s208 + $0x30] sm:$0xff]
        %v253 = vld [vmem:[%s208 + $0x38] sm:$0xff]
        %v254 = vld [vmem:[%s208 + $0x40] sm:$0xff]
        %v255 = vld [vmem:[%s208 + $0x48] sm:$0xff]
        %v256 = vld [vmem:[%s208 + $0x50] sm:$0xff]
        %v257 = vld [vmem:[%s208 + $0x58] sm:$0xff]
        %v258 = vld [vmem:[%s208 + $0x60] sm:$0xff]
        %v259 = vld [vmem:[%s208 + $0x68] sm:$0xff]
        %v260 = vld [vmem:[%s208 + $0x70] sm:$0xff]
        %v261 = vld [vmem:[%s208 + $0x78] sm:$0xff]
        %v262 = vld [vmem:[%s208 + $0x80] sm:$0xff]
        %v263 = vld [vmem:[%s208 + $0x88] sm:$0xff]
        %v264 = vld [vmem:[%s208 + $0x90] sm:$0xff]
        %v265 = vld [vmem:[%s208 + $0x98] sm:$0xff]
        %v266 = vld [vmem:[%s208 + $0xa0] sm:$0xff]
        %v267 = vld [vmem:[%s208 + $0xa8] sm:$0xff]
        %v268 = vld [vmem:[%s208 + $0xb0] sm:$0xff]
        %v269 = vld [vmem:[%s208 + $0xb8] sm:$0xff]
        %v270 = vld [vmem:[%s208 + $0xc0] sm:$0xff]
        %v271 = vld [vmem:[%s208 + $0xc8] sm:$0xff]
        %v272 = vld [vmem:[%s208 + $0xd0] sm:$0xff]
        %v273 = vld [vmem:[%s208 + $0xd8] sm:$0xff]
        %v274 = vld [vmem:[%s208 + $0xe0] sm:$0xff]
        %v275 = vld [vmem:[%s208 + $0xe8] sm:$0xff]
        %v276 = vld [vmem:[%s208 + $0xf0] sm:$0xff]
        %v277 = vld [vmem:[%s208 + $0xf8] sm:$0xff]
        %v278 = vpack.c.bf16 %v247, %v246
        %v279 = vpack.c.bf16 %v249, %v248
        %v280 = vpack.c.bf16 %v251, %v250
        %v281 = vpack.c.bf16 %v253, %v252
        %v282 = vpack.c.bf16 %v255, %v254
        %v283 = vpack.c.bf16 %v257, %v256
        %v284 = vpack.c.bf16 %v259, %v258
        %v285 = vpack.c.bf16 %v261, %v260
        %v286 = vpack.c.bf16 %v263, %v262
        %v287 = vpack.c.bf16 %v265, %v264
        %v288 = vpack.c.bf16 %v267, %v266
        %v289 = vpack.c.bf16 %v269, %v268
        %v290 = vpack.c.bf16 %v271, %v270
        %v291 = vpack.c.bf16 %v273, %v272
        %v292 = vpack.c.bf16 %v275, %v274
        %v293 = vpack.c.bf16 %v277, %v276
        %v294 = vld [vmem:[#allocation5] sm:$0xf]
        %v295 = vld [vmem:[#allocation5 + $0x4] sm:$0xf]
        %v296 = vld [vmem:[#allocation5 + $0x8] sm:$0xf]
        %v297 = vld [vmem:[#allocation5 + $0xc] sm:$0xf]
        %v298 = vld [vmem:[#allocation5 + $0x10] sm:$0xf]
        %v299 = vld [vmem:[#allocation5 + $0x14] sm:$0xf]
        %v300 = vld [vmem:[%s243] sm:$0x1]
        %v302 = vperm.slane %v300, 0
        %v310 = vunpack.c.l.b16 %v294
        %v311 = vunpack.c.l.b16 %v295
        %v312 = vunpack.c.l.b16 %v296
        %v313 = vunpack.c.l.b16 %v297
        %v314 = vunpack.c.l.b16 %v298
        %v315 = vunpack.c.l.b16 %v299
        %v316 = vpack.c.b16 %v311, %v310
        %v317 = vpack.c.b16 %v313, %v312
        %v318 = vpack.c.b16 %v315, %v314
        %vm322 = vcmask 392192
        %v324 = vsel %vm322, %v278, 0
        %v327 = vsel %vm322, %v279, 0
        %v330 = vsel %vm322, %v280, 0
        %v333 = vsel %vm322, %v281, 0
        %v336 = vsel %vm322, %v282, 0
        %v339 = vsel %vm322, %v283, 0
        %v342 = vsel %vm322, %v284, 0
        %v345 = vsel %vm322, %v285, 0
        %v348 = vsel %vm322, %v286, 0
        %v351 = vsel %vm322, %v287, 0
        %v354 = vsel %vm322, %v288, 0
        %v357 = vsel %vm322, %v289, 0
        %v360 = vsel %vm322, %v290, 0
        %v363 = vsel %vm322, %v291, 0
        %v366 = vsel %vm322, %v292, 0
        %v369 = vsel %vm322, %v293, 0
        %371 = vmatpush.bf16.msra.mxu0 0
        %372 = vmatpush.bf16.msra.mxu0 0
        %373 = vmatpush.bf16.msra.mxu0 0
        %374 = vmatpush.bf16.msra.mxu0 0
        %375 = vmatpush.bf16.msra.mxu0 0
        %376 = vmatpush.bf16.msra.mxu0 %v318
        %377 = vmatpush.bf16.msra.mxu0 %v317
        %378 = vmatpush.bf16.msra.mxu0 %v316
        %379 = vmatmul.bf16.gmra.mxu0 %v324
        %v380 = vpop.f32.mrf.mxu0
        %v381 = vadd.f32 %v302, %v380
        %v382 = vpop.f32.mrf.mxu0
        %v383 = vadd.f32 %v302, %v382
        %384 = vmatmul.bf16.gmra.mxu0 %v327
        %v385 = vpop.f32.mrf.mxu0
        %v386 = vadd.f32 %v302, %v385
        %v387 = vpop.f32.mrf.mxu0
        %v388 = vadd.f32 %v302, %v387
        %389 = vmatmul.bf16.gmra.mxu0 %v330
        %v390 = vpop.f32.mrf.mxu0
        %v391 = vadd.f32 %v302, %v390
        %v392 = vpop.f32.mrf.mxu0
        %v393 = vadd.f32 %v302, %v392
        %394 = vmatmul.bf16.gmra.mxu0 %v333
        %v395 = vpop.f32.mrf.mxu0
        %v396 = vadd.f32 %v302, %v395
        %v397 = vpop.f32.mrf.mxu0
        %v398 = vadd.f32 %v302, %v397
        %399 = vmatmul.bf16.gmra.mxu0 %v336
        %v400 = vpop.f32.mrf.mxu0
        %v401 = vadd.f32 %v302, %v400
        %v402 = vpop.f32.mrf.mxu0
        %v403 = vadd.f32 %v302, %v402
        %404 = vmatmul.bf16.gmra.mxu0 %v339
        %v405 = vpop.f32.mrf.mxu0
        %v406 = vadd.f32 %v302, %v405
        %v407 = vpop.f32.mrf.mxu0
        %v408 = vadd.f32 %v302, %v407
        %409 = vmatmul.bf16.gmra.mxu0 %v342
        %v410 = vpop.f32.mrf.mxu0
        %v411 = vadd.f32 %v302, %v410
        %v412 = vpop.f32.mrf.mxu0
        %v413 = vadd.f32 %v302, %v412
        %414 = vmatmul.bf16.gmra.mxu0 %v345
        %v415 = vpop.f32.mrf.mxu0
        %v416 = vadd.f32 %v302, %v415
        %v417 = vpop.f32.mrf.mxu0
        %v418 = vadd.f32 %v302, %v417
        %419 = vmatmul.bf16.gmra.mxu0 %v348
        %v420 = vpop.f32.mrf.mxu0
        %v421 = vadd.f32 %v302, %v420
        %v422 = vpop.f32.mrf.mxu0
        %v423 = vadd.f32 %v302, %v422
        %424 = vmatmul.bf16.gmra.mxu0 %v351
        %v425 = vpop.f32.mrf.mxu0
        %v426 = vadd.f32 %v302, %v425
        %v427 = vpop.f32.mrf.mxu0
        %v428 = vadd.f32 %v302, %v427
        %429 = vmatmul.bf16.gmra.mxu0 %v354
        %v430 = vpop.f32.mrf.mxu0
        %v431 = vadd.f32 %v302, %v430
        %v432 = vpop.f32.mrf.mxu0
        %v433 = vadd.f32 %v302, %v432
        %434 = vmatmul.bf16.gmra.mxu0 %v357
        %v435 = vpop.f32.mrf.mxu0
        %v436 = vadd.f32 %v302, %v435
        %v437 = vpop.f32.mrf.mxu0
        %v438 = vadd.f32 %v302, %v437
        %439 = vmatmul.bf16.gmra.mxu0 %v360
        %v440 = vpop.f32.mrf.mxu0
        %v441 = vadd.f32 %v302, %v440
        %v442 = vpop.f32.mrf.mxu0
        %v443 = vadd.f32 %v302, %v442
        %444 = vmatmul.bf16.gmra.mxu0 %v363
        %v445 = vpop.f32.mrf.mxu0
        %v446 = vadd.f32 %v302, %v445
        %v447 = vpop.f32.mrf.mxu0
        %v448 = vadd.f32 %v302, %v447
        %449 = vmatmul.bf16.gmra.mxu0 %v366
        %v450 = vpop.f32.mrf.mxu0
        %v451 = vadd.f32 %v302, %v450
        %v452 = vpop.f32.mrf.mxu0
        %v453 = vadd.f32 %v302, %v452
        %454 = vmatmul.bf16.gmra.mxu0 %v369
        %v455 = vpop.f32.mrf.mxu0
        %v456 = vadd.f32 %v302, %v455
        %v457 = vpop.f32.mrf.mxu0
        %v458 = vadd.f32 %v302, %v457
        %459 = vdwg.mxu0
        %460 = vst [vmem:[%s239] sm:$0xff] %v381
        %461 = vst [vmem:[%s239 + $0x8] sm:$0xff] %v383
        %462 = vst [vmem:[%s239 + $0x10] sm:$0xff] %v386
        %463 = vst [vmem:[%s239 + $0x18] sm:$0xff] %v388
        %464 = vst [vmem:[%s239 + $0x20] sm:$0xff] %v391
        %465 = vst [vmem:[%s239 + $0x28] sm:$0xff] %v393
        %466 = vst [vmem:[%s239 + $0x30] sm:$0xff] %v396
        %467 = vst [vmem:[%s239 + $0x38] sm:$0xff] %v398
        %468 = vst [vmem:[%s239 + $0x40] sm:$0xff] %v401
        %469 = vst [vmem:[%s239 + $0x48] sm:$0xff] %v403
        %470 = vst [vmem:[%s239 + $0x50] sm:$0xff] %v406
        %471 = vst [vmem:[%s239 + $0x58] sm:$0xff] %v408
        %472 = vst [vmem:[%s239 + $0x60] sm:$0xff] %v411
        %473 = vst [vmem:[%s239 + $0x68] sm:$0xff] %v413
        %474 = vst [vmem:[%s239 + $0x70] sm:$0xff] %v416
        %475 = vst [vmem:[%s239 + $0x78] sm:$0xff] %v418
        %476 = vst [vmem:[%s239 + $0x80] sm:$0xff] %v421
        %477 = vst [vmem:[%s239 + $0x88] sm:$0xff] %v423
        %478 = vst [vmem:[%s239 + $0x90] sm:$0xff] %v426
        %479 = vst [vmem:[%s239 + $0x98] sm:$0xff] %v428
        %480 = vst [vmem:[%s239 + $0xa0] sm:$0xff] %v431
        %481 = vst [vmem:[%s239 + $0xa8] sm:$0xff] %v433
        %482 = vst [vmem:[%s239 + $0xb0] sm:$0xff] %v436
        %483 = vst [vmem:[%s239 + $0xb8] sm:$0xff] %v438
        %484 = vst [vmem:[%s239 + $0xc0] sm:$0xff] %v441
        %485 = vst [vmem:[%s239 + $0xc8] sm:$0xff] %v443
        %486 = vst [vmem:[%s239 + $0xd0] sm:$0xff] %v446
        %487 = vst [vmem:[%s239 + $0xd8] sm:$0xff] %v448
        %488 = vst [vmem:[%s239 + $0xe0] sm:$0xff] %v451
        %489 = vst [vmem:[%s239 + $0xe8] sm:$0xff] %v453
        %490 = vst [vmem:[%s239 + $0xf0] sm:$0xff] %v456
        %491 = vst [vmem:[%s239 + $0xf8] sm:$0xff] %v458
        %s492 = sand.u32 %s121, 1
        %s493 = scalar_lea.sflag [#allocation4], %s492
        %s494 = sand.u32 %s121, 1
        %s495 = smul.addr %s494, 256
        %s496 = scalar_lea.vmem [#allocation7], %s495
        // Predicated region
        $region41: #{pallas_linear.1} parent=31 // pred_check
          %p497 = pneg %p131
        $region42: #{pallas_linear.1} parent=31 // pred_check_branch
          %499 = sbr.rel (%p497) target = $region44
        $region43: #{pallas_linear.1} parent=31 // pred_region
          %s500 = smul.u32 32, %s25
          %502 = vsyncadd %s493, 0
          %s503 = sadd.s32 %s26, %s500
          %s504 = smul.addr %s503, 8
          %s505 = scalar_lea.hbm %s3, %s504
          %s506 = sshll.u32 %s496, 4
          %s507 = int_to_ptr.vmem [resolvable:$true] %s506
          %s508 = sshll.u32 %s505, 4
          %s509 = int_to_ptr.hbm [resolvable:$true] %s508
          %514 = dma.vmem_to_hbm [thread:$0]  %s507, 4096, %s509, %s493, 128, 128, 8
        $region44: #{pallas_linear.1} parent=31 // pred_fallthru
          _
      $region32: #{pallas_linear.1} parent=5 // pred_fallthru
        _
      %p515 = scmp.le.s32.totalorder 2, %s16
      // Predicated region
      $region45: #{pallas_linear.1} parent=5 // pred_check
        %p516 = pneg %p515
      $region46: #{pallas_linear.1} parent=5 // pred_check_branch
        %518 = sbr.rel (%p516) target = $region48
      $region47: #{pallas_linear.1} parent=5 // pred_region
        %s519 = ssub.s32 %s16, 2
        // Predicated region
        $region49: #{pallas_linear.1} parent=47 // pred_check
          %p520 = pneg %p137
        $region50: #{pallas_linear.1} parent=47 // pred_check_branch
          %522 = sbr.rel (%p520) target = $region52
        $region51: #{pallas_linear.1} parent=47 // pred_region
          %s523 = sand.u32 %s122, 1
          %s524 = scalar_lea.sflag [#allocation4], %s523
          %s525 = sand.u32 %s122, 1
          %s526 = smul.addr %s525, 256
          %s527 = scalar_lea.vmem [#allocation7], %s526
          %529 = dma.done %s524, 4096
        $region52: #{pallas_linear.1} parent=47 // pred_fallthru
          _
      $region48: #{pallas_linear.1} parent=5 // pred_fallthru
        _
    $region6: #{pallas_linear.1} parent=1 // loop_footer
      %s20 = sadd.s32 1, %s16
    $region7: #{pallas_linear.1} parent=1 // loop_footer_branch
      %15 = sbr.rel target = $region3
    $region8: #{pallas_linear.1} parent=1 // loop_exit
      _
    %530 = vsyncpa [#allocation3], 1
    %s531 = scalar_lea.sflag [#allocation3], 1
    %532 = vsyncpa %s531, 1
    %533 = vsyncpa [#allocation6], 1
    %534 = vsyncpa [#allocation4], 1
    %s535 = scalar_lea.sflag [#allocation4], 1
    %536 = vsyncpa %s535, 1

</llo_original>
